<compile_context>
chip_gen: v7x
topology: tpu7x:2x2x1
jax: 0.10.0
libtpu: 0.0.40
codegen_flags: <defaults>
</compile_context>

<pallas_src>
import functools

import jax
import jax.numpy as jnp
from jax import lax
from jax.experimental import pallas as pl
from jax.experimental.pallas import tpu as pltpu

LANE = 128             # lane width
MAX_BLOCK_ROWS = 8192  # 8192*128*4B = 4 MiB per f32 input tile per grid step
NUM_CORE_GROUPS = 2    # leading "parallel" axis -> engages both TCs on v7x
ACC_ROWS = 8           # single-vreg (8, 128) f32 accumulator


def _mse_kernel(x_ref, y_ref, out_ref, acc_ref, *, total_rows, block_rows,
                blocks_per_group, needs_mask):
    """Accumulate sum((x - y)^2) per core-group into an (8, 128) accumulator."""
    g = pl.program_id(0)   # core group ("parallel")
    i = pl.program_id(1)   # streaming block within the group ("arbitrary")

    @pl.when(i == 0)
    def _():
        acc_ref[...] = jnp.zeros_like(acc_ref)

    d = x_ref[...].astype(jnp.float32) - y_ref[...].astype(jnp.float32)
    sq = d * d

    def _accumulate(vals):
        if block_rows % ACC_ROWS == 0:
            # (8,128)-tile-aligned reshape (free) + cross-vreg VPU adds.
            acc_ref[...] += jnp.sum(
                vals.reshape(block_rows // ACC_ROWS, ACC_ROWS, LANE), axis=0)
        else:
            # Only reachable for a tiny single-block input (rows < 8-aligned);
            # one cross-sublane reduce, perf-irrelevant.
            acc_ref[0:1, :] += jnp.sum(vals, axis=0, keepdims=True)

    if needs_mask:
        # Only partial / out-of-range blocks pay for the iota+select; fully
        # valid blocks take the plain path.
        block_start = (g * blocks_per_group + i) * block_rows
        is_full = (block_start + block_rows) <= total_rows

        @pl.when(is_full)
        def _():
            _accumulate(sq)

        @pl.when(jnp.logical_not(is_full))
        def _():
            row_ids = lax.broadcasted_iota(jnp.int32, sq.shape, 0)
            valid = (block_start + row_ids) < total_rows
            _accumulate(jnp.where(valid, sq, 0.0))
    else:
        _accumulate(sq)

    @pl.when(i == pl.num_programs(1) - 1)
    def _():
        out_ref[...] = acc_ref[...]


def mse_loss(x, y):
    """MSE loss with 'mean' reduction, matching F.mse_loss(x, y)."""
    assert x.shape == y.shape, "MSELoss requires input/target of identical shape"
    n = x.size

    xf = x.reshape(-1)
    yf = y.reshape(-1)

    # Lane-unaligned tail (< 128 elements): tiny plain-JAX sum, no pad copy.
    rem = n % LANE
    n_aligned = n - rem
    if rem:
        dt = xf[n_aligned:].astype(jnp.float32) - yf[n_aligned:].astype(jnp.float32)
        tail_sum = jnp.sum(dt * dt)
    else:
        tail_sum = jnp.float32(0.0)

    if n_aligned == 0:
        # Degenerate tiny input (< 128 elements): nothing for the kernel to do.
        return tail_sum / jnp.float32(n)

    rows = n_aligned // LANE
    x2 = xf[:n_aligned].reshape(rows, LANE)
    y2 = yf[:n_aligned].reshape(rows, LANE)

    # Large streaming tile; full-array block when the input is small.
    block_rows = MAX_BLOCK_ROWS if rows >= MAX_BLOCK_ROWS else rows
    num_blocks = pl.cdiv(rows, block_rows)
    num_groups = min(NUM_CORE_GROUPS, num_blocks)
    blocks_per_group = pl.cdiv(num_blocks, num_groups)
    # Mask needed if any block is partial or the padded grid overshoots.
    needs_mask = (num_groups * blocks_per_group * block_rows) != rows

    def in_index_map(g, i):
        blk = g * blocks_per_group + i
        # Clamp so padded (fully out-of-range) blocks re-read a valid window;
        # their contribution is zeroed by the in-kernel row mask.
        return (jnp.minimum(blk, num_blocks - 1), 0)

    kernel = functools.partial(
        _mse_kernel,
        total_rows=rows,
        block_rows=block_rows,
        blocks_per_group=blocks_per_group,
        needs_mask=needs_mask,
    )

    itemsize = x.dtype.itemsize
    tile_bytes = block_rows * LANE * itemsize
    # 2 inputs x 2 pipeline buffers + slack; explicit so large tiles fit on
    # v5e (16 MiB scoped default) and stay well under v7x's 64 MiB physical.
    vmem_limit = int(min(max(4 * tile_bytes + (2 << 20), 8 << 20), 48 << 20))

    partials = pl.pallas_call(
        kernel,
        out_shape=jax.ShapeDtypeStruct((num_groups * ACC_ROWS, LANE), jnp.float32),
        grid_spec=pltpu.PrefetchScalarGridSpec(
            num_scalar_prefetch=0,
            grid=(num_groups, blocks_per_group),
            in_specs=[
                pl.BlockSpec((block_rows, LANE), in_index_map),
                pl.BlockSpec((block_rows, LANE), in_index_map),
            ],
            out_specs=pl.BlockSpec((ACC_ROWS, LANE), lambda g, i: (g, 0)),
            scratch_shapes=[pltpu.VMEM((ACC_ROWS, LANE), jnp.float32)],
        ),
        compiler_params=pltpu.CompilerParams(
            dimension_semantics=("parallel", "arbitrary"),
            vmem_limit_bytes=vmem_limit,
        ),
        cost_estimate=pl.CostEstimate(
            flops=3 * n_aligned,
            transcendentals=0,
            bytes_accessed=2 * n_aligned * itemsize,
        ),
    )(x2, y2)

    total = jnp.sum(partials) + tail_sum
    # Return a scalar, matching torch's 0-dim loss tensor.
    return total / jnp.float32(n)


if __name__ == "__main__":
    key = jax.random.PRNGKey(0)
    k1, k2 = jax.random.split(key)
    shape = (2, 4, 16, 16)  # NCHW
    x = jax.random.normal(k1, shape, dtype=jnp.float32)
    y = jax.random.normal(k2, shape, dtype=jnp.float32)

    loss = mse_loss(x, y)
    jax.block_until_ready(loss)

    # Sanity check against plain-JAX reference.
    ref = jnp.mean((x - y) ** 2)
    assert jnp.allclose(loss, ref, rtol=1e-6, atol=1e-6), (loss, ref)

    print("KERNEL_OK")
</pallas_src>

<mosaic_0001>
module attributes {stable_mosaic.version = 11 : i64} {
  func.func @_mse_kernel(%arg0: i32, %arg1: i32, %arg2: memref<16x128xf32, #tpu.memory_space<vmem>>, %arg3: memref<16x128xf32, #tpu.memory_space<vmem>>, %arg4: memref<8x128xf32, #tpu.memory_space<vmem>>, %arg5: memref<8x128xf32, #tpu.memory_space<vmem>>) attributes {dimension_semantics = [#tpu.dimension_semantics<parallel>, #tpu.dimension_semantics<arbitrary>], iteration_bounds = array<i64: 1, 1>, scalar_prefetch = 0 : i64, scratch_operands = 1 : i64, tpu.core_type = #tpu.core_type<tc>, window_params = [{transform_indices = @transform_0, window_bounds = array<i64: 16, 128>}, {transform_indices = @transform_1, window_bounds = array<i64: 16, 128>}, {transform_indices = @transform_2, window_bounds = array<i64: 8, 128>}]} {
    %c0_i32 = arith.constant 0 : i32
    %0 = arith.cmpi eq, %arg1, %c0_i32 : i32
    %1 = arith.extui %0 : i1 to i32
    %c0_i32_0 = arith.constant 0 : i32
    %2 = arith.cmpi ne, %1, %c0_i32_0 : i32
    scf.if %2 {
      %cst_10 = arith.constant 0.000000e+00 : f32
      %15 = vector.broadcast %cst_10 : f32 to vector<8x128xf32>
      %c0_11 = arith.constant 0 : index
      %c0_12 = arith.constant 0 : index
      %16 = vector.load %arg5[%c0_11, %c0_12] : memref<8x128xf32, #tpu.memory_space<vmem>>, vector<8x128xf32>
      tpu.vector_store %arg5[%c0_11, %c0_12], %15 {strides = array<i32>} : memref<8x128xf32, #tpu.memory_space<vmem>>, vector<8x128xf32>,
    } else {
    }
    %c0 = arith.constant 0 : index
    %c0_1 = arith.constant 0 : index
    %3 = vector.load %arg2[%c0, %c0_1] : memref<16x128xf32, #tpu.memory_space<vmem>>, vector<16x128xf32>
    %c0_2 = arith.constant 0 : index
    %c0_3 = arith.constant 0 : index
    %4 = vector.load %arg3[%c0_2, %c0_3] : memref<16x128xf32, #tpu.memory_space<vmem>>, vector<16x128xf32>
    %5 = arith.subf %3, %4 : vector<16x128xf32>
    %6 = arith.mulf %5, %5 : vector<16x128xf32>
    %c0_4 = arith.constant 0 : index
    %c0_5 = arith.constant 0 : index
    %7 = vector.load %arg5[%c0_4, %c0_5] : memref<8x128xf32, #tpu.memory_space<vmem>>, vector<8x128xf32>
    %8 = vector.shape_cast %6 : vector<16x128xf32> to vector<2x8x128xf32>
    %cst = arith.constant dense<0.000000e+00> : vector<8x128xf32>
    %9 = vector.multi_reduction <add>, %8, %cst [0] : vector<2x8x128xf32> to vector<8x128xf32>
    %10 = arith.addf %7, %9 : vector<8x128xf32>
    %c0_6 = arith.constant 0 : index
    %c0_7 = arith.constant 0 : index
    %11 = vector.load %arg5[%c0_6, %c0_7] : memref<8x128xf32, #tpu.memory_space<vmem>>, vector<8x128xf32>
    tpu.vector_store %arg5[%c0_6, %c0_7], %10 {strides = array<i32>} : memref<8x128xf32, #tpu.memory_space<vmem>>, vector<8x128xf32>,
    %c0_i32_8 = arith.constant 0 : i32
    %12 = arith.cmpi eq, %arg1, %c0_i32_8 : i32
    %13 = arith.extui %12 : i1 to i32
    %c0_i32_9 = arith.constant 0 : i32
    %14 = arith.cmpi ne, %13, %c0_i32_9 : i32
    scf.if %14 {
      %c0_10 = arith.constant 0 : index
      %c0_11 = arith.constant 0 : index
      %15 = vector.load %arg5[%c0_10, %c0_11] : memref<8x128xf32, #tpu.memory_space<vmem>>, vector<8x128xf32>
      %c0_12 = arith.constant 0 : index
      %c0_13 = arith.constant 0 : index
      %16 = vector.load %arg4[%c0_12, %c0_13] : memref<8x128xf32, #tpu.memory_space<vmem>>, vector<8x128xf32>
      tpu.vector_store %arg4[%c0_12, %c0_13], %15 {strides = array<i32>} : memref<8x128xf32, #tpu.memory_space<vmem>>, vector<8x128xf32>,
    } else {
    }
    return
  }
  func.func @transform_0(%arg0: i32, %arg1: i32) -> (i32, i32) {
    %c1_i32 = arith.constant 1 : i32
    %0 = arith.muli %arg0, %c1_i32 : i32
    %1 = arith.addi %0, %arg1 : i32
    %c0_i32 = arith.constant 0 : i32
    %2 = arith.minsi %1, %c0_i32 : i32
    %c0_i32_0 = arith.constant 0 : i32
    %c0_i32_1 = arith.constant 0 : i32
    return %2, %c0_i32_0 : i32, i32
  }
  func.func @transform_1(%arg0: i32, %arg1: i32) -> (i32, i32) {
    %c1_i32 = arith.constant 1 : i32
    %0 = arith.muli %arg0, %c1_i32 : i32
    %1 = arith.addi %0, %arg1 : i32
    %c0_i32 = arith.constant 0 : i32
    %2 = arith.minsi %1, %c0_i32 : i32
    %c0_i32_0 = arith.constant 0 : i32
    %c0_i32_1 = arith.constant 0 : i32
    return %2, %c0_i32_0 : i32, i32
  }
  func.func @transform_2(%arg0: i32, %arg1: i32) -> (i32, i32) {
    %c0_i32 = arith.constant 0 : i32
    %c0_i32_0 = arith.constant 0 : i32
    return %arg0, %c0_i32 : i32, i32
  }
}

</mosaic_0001>

<llo_original>
// kernel: tpu_custom_call.1
$region0: #{tpu_custom_call.1}
  #allocation0 [shape = 'u32[]', space=smem, size = 0x4, offset = 0x4, fixed_abs, tag = 'smem constant byte address 0x4 - core index']
  #allocation1 [shape = 'u32[144,128]{1,0:T(1,128)}', space=vmem, size = 0x12000, scoped, tag = 'internal scratch']
  #allocation2 [shape = 'f32[8,128]{1,0:T(8,128)}', space=vmem, size = 0x1000, scoped, tag = 'scratch operand']
  %s0 = inlined_call_operand.hbm [shape: f32[16,128], index: 0, kind: input, shape index: {}]
  %s1 = inlined_call_operand.hbm [shape: f32[16,128], index: 1, kind: input, shape index: {}]
  %s2 = inlined_call_operand.hbm [shape: f32[8,128], index: 2, kind: output, shape index: {}]
  %s3 = sld [smem:[#allocation0]]
  $region34: #{tpu_custom_call.1} parent=0
    _
  %s5 = ssub.s32 1, %s3
  %s6 = scalar_select 0, %s5, %s3
  $region1: #{tpu_custom_call.1} parent=0
    #allocation3 [shape = 'u8[8192]{0}', space=vmem, size = 0x2000, scoped, tag = 'input window, operand 0, single buffered']
    #allocation4 [shape = 's32[1]{0}', space=sflag, size = 0x4, scoped, tag = 'scoped memory for tpu_custom_call.1']
    #allocation5 [shape = 's32[1]{0}', space=sflag, size = 0x4, scoped, tag = 'scoped memory for tpu_custom_call.1']
    #allocation6 [shape = 'u8[8192]{0}', space=vmem, size = 0x2000, scoped, tag = 'input window, operand 1, single buffered']
    #allocation7 [shape = 's32[1]{0}', space=sflag, size = 0x4, scoped, tag = 'scoped memory for tpu_custom_call.1']
    #allocation8 [shape = 'u8[4096]{0}', space=vmem, size = 0x1000, scoped, tag = 'output window, operand 0, single buffered']
    %7 = vsyncpa [#allocation4], 0
    %8 = vsyncpa [#allocation7], 0
    %9 = vsyncpa [#allocation5], 0
    // Predicated region
    $region2: #{tpu_custom_call.1} parent=1 // pred_check
      _
    $region3: #{tpu_custom_call.1} parent=1 // pred_check_branch
      %11 = sbr.rel (0) target = $region5
    $region4: #{tpu_custom_call.1} parent=1 // pred_region
      %s12 = sadd.s32 0, 0
      %p13 = scmp.lt.s32.totalorder %s12, 0
      %s14 = scalar_select %p13, %s12, 0
      %s15 = smul.u32 2, %s14
      %s17 = ssub.s32 256, 256
      %18 = vsyncadd [#allocation4], %s17
      %s19 = smul.addr %s15, 128
      %s20 = scalar_lea.hbm %s0, %s19
      %s21 = sshll.u32 [#allocation3], 4
      %s22 = int_to_ptr.vmem [resolvable:$true] %s21
      %27 = dma.hbm_to_vmem [thread:$0]  %s20, 256, %s22, [#allocation4], 128, 128, 8
    $region5: #{tpu_custom_call.1} parent=1 // pred_fallthru
      _
    // Predicated region
    $region6: #{tpu_custom_call.1} parent=1 // pred_check
      _
    $region7: #{tpu_custom_call.1} parent=1 // pred_check_branch
      %29 = sbr.rel (0) target = $region9
    $region8: #{tpu_custom_call.1} parent=1 // pred_region
      %s30 = sadd.s32 0, 0
      %p31 = scmp.lt.s32.totalorder %s30, 0
      %s32 = scalar_select %p31, %s30, 0
      %s33 = smul.u32 2, %s32
      %s35 = ssub.s32 256, 256
      %36 = vsyncadd [#allocation7], %s35
      %s37 = smul.addr %s33, 128
      %s38 = scalar_lea.hbm %s1, %s37
      %s39 = sshll.u32 [#allocation6], 4
      %s40 = int_to_ptr.vmem [resolvable:$true] %s39
      %45 = dma.hbm_to_vmem [thread:$0]  %s38, 256, %s40, [#allocation7], 128, 128, 8
    $region9: #{tpu_custom_call.1} parent=1 // pred_fallthru
      _
    // Predicated region
    $region10: #{tpu_custom_call.1} parent=1 // pred_check
      _
    $region11: #{tpu_custom_call.1} parent=1 // pred_check_branch
      %47 = sbr.rel (0) target = $region13
    $region12: #{tpu_custom_call.1} parent=1 // pred_region
      %48 = dma.done [#allocation4], 256
    $region13: #{tpu_custom_call.1} parent=1 // pred_fallthru
      _
    // Predicated region
    $region14: #{tpu_custom_call.1} parent=1 // pred_check
      _
    $region15: #{tpu_custom_call.1} parent=1 // pred_check_branch
      %50 = sbr.rel (0) target = $region17
    $region16: #{tpu_custom_call.1} parent=1 // pred_region
      %51 = dma.done [#allocation7], 256
    $region17: #{tpu_custom_call.1} parent=1 // pred_fallthru
      _
    %s52 = sadd.s32 0, 0
    %p53 = scmp.lt.s32.totalorder %s52, 0
    %s54 = scalar_select %p53, %s52, 0
    %s55 = smul.u32 2, %s54
    %s56 = sadd.s32 0, 0
    %p57 = scmp.lt.s32.totalorder %s56, 0
    %s58 = scalar_select %p57, %s56, 0
    %s59 = smul.u32 2, %s58
    %p60 = scmp.eq.s32.totalorder 0, 0
    // Predicated region
    $region18: #{tpu_custom_call.1} parent=1 // pred_check
      %p61 = pneg %p60
    $region19: #{tpu_custom_call.1} parent=1 // pred_check_branch
      %63 = sbr.rel (%p61) target = $region21
    $region20: #{tpu_custom_call.1} parent=1 // pred_region
      %64 = vst [vmem:[#allocation2] sm:$0xff] 0.0
    $region21: #{tpu_custom_call.1} parent=1 // pred_fallthru
      _
    %v65 = vld [vmem:[#allocation3] sm:$0xff]
    %v66 = vld [vmem:[#allocation3 + $0x8] sm:$0xff]
    %v67 = vld [vmem:[#allocation6] sm:$0xff]
    %v68 = vld [vmem:[#allocation6 + $0x8] sm:$0xff]
    %v69 = vsub.f32 %v65, %v67
    %v70 = vsub.f32 %v66, %v68
    %v71 = vmul.f32 %v69, %v69
    %v72 = vmul.f32 %v70, %v70
    %v73 = vld [vmem:[#allocation2] sm:$0xff]
    %v74 = vadd.f32 %v71, %v72
    %v75 = vadd.f32 %v73, %v74
    %76 = vst [vmem:[#allocation2] sm:$0xff] %v75
    // Predicated region
    $region22: #{tpu_custom_call.1} parent=1 // pred_check
      %p77 = pneg %p60
    $region23: #{tpu_custom_call.1} parent=1 // pred_check_branch
      %79 = sbr.rel (%p77) target = $region25
    $region24: #{tpu_custom_call.1} parent=1 // pred_region
      %v80 = vld [vmem:[#allocation2] sm:$0xff]
      %81 = vst [vmem:[#allocation8] sm:$0xff] %v80
    $region25: #{tpu_custom_call.1} parent=1 // pred_fallthru
      _
    // Predicated region
    $region26: #{tpu_custom_call.1} parent=1 // pred_check
      _
    $region27: #{tpu_custom_call.1} parent=1 // pred_check_branch
      %83 = sbr.rel (0) target = $region29
    $region28: #{tpu_custom_call.1} parent=1 // pred_region
      %s85 = ssub.s32 128, 128
      %86 = vsyncadd [#allocation5], %s85
      %s88 = sshll.u32 [#allocation8], 4
      %s89 = int_to_ptr.vmem [resolvable:$true] %s88
      %91 = dma.vmem_to_hbm [thread:$0]  %s89, 128, %s2, [#allocation5]
    $region29: #{tpu_custom_call.1} parent=1 // pred_fallthru
      _
    // Predicated region
    $region30: #{tpu_custom_call.1} parent=1 // pred_check
      _
    $region31: #{tpu_custom_call.1} parent=1 // pred_check_branch
      %93 = sbr.rel (0) target = $region33
    $region32: #{tpu_custom_call.1} parent=1 // pred_region
      %94 = dma.done [#allocation5], 128
    $region33: #{tpu_custom_call.1} parent=1 // pred_fallthru
      _
    %95 = vsyncpa [#allocation4], 1
    %96 = vsyncpa [#allocation7], 1
    %97 = vsyncpa [#allocation5], 1

</llo_original>
